<compile_context>
chip_gen: v5e
topology: v5e:2x2
jax: 0.10.0
libtpu: 0.0.40
codegen_flags: <defaults>
</compile_context>

<pallas_src>
import jax
import jax.numpy as jnp
from jax.experimental import pallas as pl
from jax.experimental.pallas import tpu as pltpu


LANE = 128                       # lane granularity (set 256 to fill v6e/v7x MXU)
_MIB = 1024 * 1024
_VMEM_BUDGET = 48 * _MIB         # headroom under v7x's 64 MiB / TensorCore


def _round_up(n, m):
    return (n + m - 1) // m * m


# ---------------------------------------------------------------------------
# Kernels
# ---------------------------------------------------------------------------
def _mlp_resident_kernel(x_ref, w1_ref, b1_ref, w2_ref, b2_ref, o_ref):
    """relu(x @ W1 + b1) @ W2 + b2 with all weights VMEM-resident."""
    # Layer 1: bf16 MXU matmul, f32 accumulation.
    h = jnp.dot(x_ref[...], w1_ref[...], preferred_element_type=jnp.float32)
    # Bias + ReLU in f32 on the VPU (v5e has no bf16 VPU).
    h = jnp.maximum(h + b1_ref[...], 0.0)
    # Layer 2: recast activation to bf16 for the MXU, accumulate in f32.
    y = jnp.dot(h.astype(w2_ref.dtype), w2_ref[...],
                preferred_element_type=jnp.float32)
    o_ref[...] = (y + b2_ref[...]).astype(o_ref.dtype)


def _mlp_htiled_kernel(x_ref, w1_ref, b1_ref, w2_ref, b2_ref, o_ref, acc_ref):
    """Same math with the hidden (H) axis tiled: grid = (batch tiles, H tiles).

    ReLU is elementwise over H, so tiling H is exact; the second matmul's
    H-reduction is accumulated in an f32 VMEM scratch (P3 pattern).
    """
    j = pl.program_id(1)

    @pl.when(j == 0)
    def _():
        acc_ref[...] = jnp.zeros_like(acc_ref)

    h = jnp.dot(x_ref[...], w1_ref[...], preferred_element_type=jnp.float32)
    h = jnp.maximum(h + b1_ref[...], 0.0)
    acc_ref[...] += jnp.dot(h.astype(w2_ref.dtype), w2_ref[...],
                            preferred_element_type=jnp.float32)

    @pl.when(j == pl.num_programs(1) - 1)
    def _():
        o_ref[...] = (acc_ref[...] + b2_ref[...]).astype(o_ref.dtype)


# ---------------------------------------------------------------------------
# Parameter preparation (padding hoisted out of the per-call path)
# ---------------------------------------------------------------------------
def prepare_bpnet_params(w1, b1, w2, b2, *, lane=LANE):
    """Pad & cast the MLP parameters ONCE.  Zero padding keeps the math exact:
    padded K/H/N rows & columns contribute exactly zero."""
    D_in, H = w1.shape
    D_out = w2.shape[1]
    Kp, Hp, Np = (_round_up(d, lane) for d in (D_in, H, D_out))
    bf16, f32 = jnp.bfloat16, jnp.float32

    w1_p = jnp.zeros((Kp, Hp), bf16).at[:D_in, :H].set(w1.astype(bf16))
    b1_p = jnp.zeros((1, Hp), f32).at[:, :H].set(b1.reshape(1, -1).astype(f32))
    w2_p = jnp.zeros((Hp, Np), bf16).at[:H, :D_out].set(w2.astype(bf16))
    b2_p = jnp.zeros((1, Np), f32).at[:, :D_out].set(b2.reshape(1, -1).astype(f32))

    return dict(w1=w1_p, b1=b1_p, w2=w2_p, b2=b2_p,
                dims=(D_in, H, D_out), padded=(Kp, Hp, Np))


# ---------------------------------------------------------------------------
# VMEM sizing + tile selection
# ---------------------------------------------------------------------------
def _resident_vmem_bytes(tm, Kp, Hp, Np, out_itemsize):
    weights = Kp * Hp * 2 + Hp * Np * 2 + (Hp + Np) * 4      # single-buffered
    stream = tm * (2 * Kp * 2 + 2 * Np * out_itemsize)       # dbl-buf x + out
    interm = tm * Hp * 6                                      # f32 h + bf16 copy
    return weights + stream + interm


def _htiled_vmem_bytes(tm, tk, Kp, Np, out_itemsize):
    blocks = 2 * (Kp * tk * 2 + tk * Np * 2) + (tk + Np) * 4  # dbl-buf w tiles
    stream = tm * (2 * Kp * 2 + 2 * Np * out_itemsize)
    interm = tm * (tk * 6 + Np * 4)                           # h tile + f32 acc
    return blocks + stream + interm


def _pick_tiling(B, Kp, Hp, Np, out_itemsize):
    """Return (tm, tk).  tk=None means the fully weight-resident path."""
    Bmax = max(_round_up(B, 16), 16)   # bf16 packs 16 sublanes per vreg

    # Prefer the resident-weight path with the biggest streaming tile that
    # fits; require >= 2 batch tiles (v7x megacore) unless the batch is tiny.
    for tm in (1024, 512, 256, 128, 64, 32, 16):
        if tm > Bmax:
            continue
        if _resident_vmem_bytes(tm, Kp, Hp, Np, out_itemsize) > _VMEM_BUDGET:
            continue
        if Bmax >= 2 * tm or tm == 16:
            return tm, None

    # Fallback: tile the hidden dimension (large H / v7x 64 MiB VMEM).
    for tm in (512, 256, 128, 64, 32, 16):
        if tm > Bmax:
            continue
        for tk in (512, 256, 128):
            if tk > Hp or Hp % tk:
                continue
            if (_htiled_vmem_bytes(tm, tk, Kp, Np, out_itemsize)
                    <= _VMEM_BUDGET and (Bmax >= 2 * tm or tm == 16)):
                return tm, tk
    return 16, 128
    # TODO(synk): also tile Kp (first matmul reduction) for extremely large D_in.


def _wspec(shape, index_map, single_buffer):
    """BlockSpec for a VMEM-resident operand (block index never changes)."""
    if single_buffer:
        # Resident operands don't need a second pipeline buffer.
        return pl.BlockSpec(shape, index_map, pipeline_mode=pl.Buffered(1))
    return pl.BlockSpec(shape, index_map)


# ---------------------------------------------------------------------------
# Fused forward
# ---------------------------------------------------------------------------
def bpnet_forward(x, params, *, tm=None, tk=None, out_dtype=jnp.float32):
    """Fused forward of BPNet's network (2-layer MLP): relu(x@W1+b1)@W2+b2."""
    D_in, H, D_out = params["dims"]
    Kp, Hp, Np = params["padded"]
    w1_p, b1_p, w2_p, b2_p = (params["w1"], params["b1"],
                              params["w2"], params["b2"])

    B = x.shape[0]
    assert x.shape[1] == D_in
    out_itemsize = jnp.dtype(out_dtype).itemsize

    if tm is None:
        tm, auto_tk = _pick_tiling(B, Kp, Hp, Np, out_itemsize)
        if tk is None:
            tk = auto_tk
    if tk is not None and Hp % tk:
        tk = LANE
    Bp = _round_up(B, tm)

    # Fast path: skip the HBM pad copy when x is already tile/lane aligned.
    bf16 = jnp.bfloat16
    if B == Bp and D_in == Kp:
        x_p = x if x.dtype == bf16 else x.astype(bf16)
    else:
        x_p = jnp.zeros((Bp, Kp), bf16).at[:B, :D_in].set(x.astype(bf16))

    # Scheduling hint + explicit scoped-VMEM limit (default limits bind first
    # on v5e 16 MiB / v6e,v7x 32 MiB; clamp at 64 MiB = v7x physical).
    flops = 2 * Bp * (Kp * Hp + Hp * Np)
    bytes_accessed = (Bp * Kp * 2 + Kp * Hp * 2 + Hp * Np * 2
                      + (Hp + Np) * 4 + Bp * Np * out_itemsize)
    cost = pl.CostEstimate(flops=flops, transcendentals=0,
                           bytes_accessed=bytes_accessed)
    if tk is None:
        est = _resident_vmem_bytes(tm, Kp, Hp, Np, out_itemsize)
    else:
        est = _htiled_vmem_bytes(tm, tk, Kp, Np, out_itemsize)
    vmem_limit = int(min(max(2 * est + 8 * _MIB, 32 * _MIB), 64 * _MIB))

    def run(single_buffer):
        if tk is None:
            # Fully weight-resident kernel, grid over batch only.
            return pl.pallas_call(
                _mlp_resident_kernel,
                out_shape=jax.ShapeDtypeStruct((Bp, Np), out_dtype),
                grid=(Bp // tm,),
                in_specs=[
                    pl.BlockSpec((tm, Kp), lambda i: (i, 0)),      # x: batch-tiled
                    _wspec((Kp, Hp), lambda i: (0, 0), single_buffer),
                    _wspec((1, Hp), lambda i: (0, 0), single_buffer),
                    _wspec((Hp, Np), lambda i: (0, 0), single_buffer),
                    _wspec((1, Np), lambda i: (0, 0), single_buffer),
                ],
                out_specs=pl.BlockSpec((tm, Np), lambda i: (i, 0)),
                compiler_params=pltpu.CompilerParams(
                    dimension_semantics=("parallel",),
                    vmem_limit_bytes=vmem_limit),
                cost_estimate=cost,
            )(x_p, w1_p, b1_p, w2_p, b2_p)
        # Hidden-dim-tiled fallback: grid = (batch tiles, H tiles).
        return pl.pallas_call(
            _mlp_htiled_kernel,
            out_shape=jax.ShapeDtypeStruct((Bp, Np), out_dtype),
            grid=(Bp // tm, Hp // tk),
            in_specs=[
                pl.BlockSpec((tm, Kp), lambda i, j: (i, 0)),
                pl.BlockSpec((Kp, tk), lambda i, j: (0, j)),
                pl.BlockSpec((1, tk), lambda i, j: (0, j)),
                pl.BlockSpec((tk, Np), lambda i, j: (j, 0)),
                _wspec((1, Np), lambda i, j: (0, 0), single_buffer),
            ],
            out_specs=pl.BlockSpec((tm, Np), lambda i, j: (i, 0)),
            scratch_shapes=[pltpu.VMEM((tm, Np), jnp.float32)],
            compiler_params=pltpu.CompilerParams(
                dimension_semantics=("parallel", "arbitrary"),
                vmem_limit_bytes=vmem_limit),
            cost_estimate=cost,
        )(x_p, w1_p, b1_p, w2_p, b2_p)

    try:
        out = run(single_buffer=True)
    except Exception:
        # pl.Buffered(1) not supported on this jax build -> default buffering.
        out = run(single_buffer=False)

    # Fast path: skip the slice copy when nothing was padded.
    if B != Bp or D_out != Np:
        out = out[:B, :D_out]
    return out


if __name__ == "__main__":
    # Deterministic parameter + input construction (synthetic, no checkpoint).
    B, D_in, H, D_out = 8, 32, 64, 16
    key = jax.random.PRNGKey(0)
    kx, k1, k2, k3, k4 = jax.random.split(key, 5)

    x = jax.random.normal(kx, (B, D_in), dtype=jnp.float32)
    w1 = jax.random.normal(k1, (D_in, H), dtype=jnp.float32) * 0.1
    b1 = jax.random.normal(k2, (1, H), dtype=jnp.float32) * 0.1
    w2 = jax.random.normal(k3, (H, D_out), dtype=jnp.float32) * 0.1
    b2 = jax.random.normal(k4, (1, D_out), dtype=jnp.float32) * 0.1

    params = prepare_bpnet_params(w1, b1, w2, b2)   # padded once, reused per call
    out = jax.block_until_ready(bpnet_forward(x, params))
    assert out.shape == (B, D_out)

    # Reference matching the kernel's bf16-MXU / f32-accumulate dtype policy.
    xb, w1b, w2b = (a.astype(jnp.bfloat16) for a in (x, w1, w2))
    h_ref = jnp.maximum(
        jnp.dot(xb, w1b, preferred_element_type=jnp.float32) + b1, 0.0)
    ref_bf16 = jnp.dot(h_ref.astype(jnp.bfloat16), w2b,
                       preferred_element_type=jnp.float32) + b2
    assert jnp.allclose(out, ref_bf16, atol=2e-2, rtol=2e-2)

    # Looser sanity check against the pure-f32 math of the original module.
    ref_f32 = jnp.maximum(x @ w1 + b1, 0.0) @ w2 + b2
    assert jnp.allclose(out, ref_f32, atol=5e-2, rtol=5e-2)

    # Exercise the hidden-dim-tiled fallback (auto-selected when the resident
    # weights would not fit VMEM, e.g. huge H on v7x) on a multi-step H grid.
    H2 = 320
    k5, k6 = jax.random.split(k4)
    w1l = jax.random.normal(k5, (D_in, H2), dtype=jnp.float32) * 0.1
    w2l = jax.random.normal(k6, (H2, D_out), dtype=jnp.float32) * 0.1
    b1l = jnp.zeros((1, H2), jnp.float32)
    params_l = prepare_bpnet_params(w1l, b1l, w2l, b2)
    out_l = jax.block_until_ready(bpnet_forward(x, params_l, tm=16, tk=128))
    ref_l = jnp.maximum(x @ w1l + b1l, 0.0) @ w2l + b2
    assert out_l.shape == (B, D_out)
    assert jnp.allclose(out_l, ref_l, atol=5e-2, rtol=5e-2)

    # TODO(synk): train_step/forward_pass/backward_pass/test_step (autograd +
    # loss reductions) are host-side training-loop logic, not forward-kernel ops.
    print("KERNEL_OK")
</pallas_src>

<mosaic_0001>
module attributes {stable_mosaic.version = 11 : i64} {
  func.func @_mlp_resident_kernel(%arg0: i32, %arg1: memref<16x128xbf16, #tpu.memory_space<vmem>>, %arg2: memref<128x128xbf16, #tpu.memory_space<vmem>>, %arg3: memref<1x128xf32, #tpu.memory_space<vmem>>, %arg4: memref<128x128xbf16, #tpu.memory_space<vmem>>, %arg5: memref<1x128xf32, #tpu.memory_space<vmem>>, %arg6: memref<16x128xf32, #tpu.memory_space<vmem>>) attributes {dimension_semantics = [#tpu.dimension_semantics<parallel>], iteration_bounds = array<i64: 1>, scalar_prefetch = 0 : i64, scratch_operands = 0 : i64, tpu.core_type = #tpu.core_type<tc>, window_params = [{transform_indices = @transform_0, window_bounds = array<i64: 16, 128>}, {pipeline_mode = #tpu.pipeline_mode<synchronous>, transform_indices = @transform_1, window_bounds = array<i64: 128, 128>}, {pipeline_mode = #tpu.pipeline_mode<synchronous>, transform_indices = @transform_2, window_bounds = array<i64: 1, 128>}, {pipeline_mode = #tpu.pipeline_mode<synchronous>, transform_indices = @transform_3, window_bounds = array<i64: 128, 128>}, {pipeline_mode = #tpu.pipeline_mode<synchronous>, transform_indices = @transform_4, window_bounds = array<i64: 1, 128>}, {transform_indices = @transform_5, window_bounds = array<i64: 16, 128>}]} {
    %c0 = arith.constant 0 : index
    %c0_0 = arith.constant 0 : index
    %0 = vector.load %arg1[%c0, %c0_0] : memref<16x128xbf16, #tpu.memory_space<vmem>>, vector<16x128xbf16>
    %c0_1 = arith.constant 0 : index
    %c0_2 = arith.constant 0 : index
    %1 = vector.load %arg2[%c0_1, %c0_2] : memref<128x128xbf16, #tpu.memory_space<vmem>>, vector<128x128xbf16>
    %cst = arith.constant dense<0.000000e+00> : vector<16x128xf32>
    %2 = tpu.matmul %0, %1, %cst {dimension_numbers = #tpu.dot_dimension_numbers<[1], [0], [0], [1], [0, 0, 1, 1], [], []>} : vector<16x128xbf16>, vector<128x128xbf16>, vector<16x128xf32> -> vector<16x128xf32>
    %c0_3 = arith.constant 0 : index
    %c0_4 = arith.constant 0 : index
    %3 = vector.load %arg3[%c0_3, %c0_4] : memref<1x128xf32, #tpu.memory_space<vmem>>, vector<1x128xf32>
    %4 = vector.broadcast %3 : vector<1x128xf32> to vector<16x128xf32>
    %5 = arith.addf %2, %4 : vector<16x128xf32>
    %cst_5 = arith.constant 0.000000e+00 : f32
    %6 = vector.broadcast %cst_5 : f32 to vector<16x128xf32>
    %7 = arith.maximumf %5, %6 : vector<16x128xf32>
    %8 = arith.truncf %7 : vector<16x128xf32> to vector<16x128xbf16>
    %c0_6 = arith.constant 0 : index
    %c0_7 = arith.constant 0 : index
    %9 = vector.load %arg4[%c0_6, %c0_7] : memref<128x128xbf16, #tpu.memory_space<vmem>>, vector<128x128xbf16>
    %cst_8 = arith.constant dense<0.000000e+00> : vector<16x128xf32>
    %10 = tpu.matmul %8, %9, %cst_8 {dimension_numbers = #tpu.dot_dimension_numbers<[1], [0], [0], [1], [0, 0, 1, 1], [], []>} : vector<16x128xbf16>, vector<128x128xbf16>, vector<16x128xf32> -> vector<16x128xf32>
    %c0_9 = arith.constant 0 : index
    %c0_10 = arith.constant 0 : index
    %11 = vector.load %arg5[%c0_9, %c0_10] : memref<1x128xf32, #tpu.memory_space<vmem>>, vector<1x128xf32>
    %12 = vector.broadcast %11 : vector<1x128xf32> to vector<16x128xf32>
    %13 = arith.addf %10, %12 : vector<16x128xf32>
    %c0_11 = arith.constant 0 : index
    %c0_12 = arith.constant 0 : index
    %14 = vector.load %arg6[%c0_11, %c0_12] : memref<16x128xf32, #tpu.memory_space<vmem>>, vector<16x128xf32>
    tpu.vector_store %arg6[%c0_11, %c0_12], %13 {strides = array<i32>} : memref<16x128xf32, #tpu.memory_space<vmem>>, vector<16x128xf32>,
    return
  }
  func.func @transform_0(%arg0: i32) -> (i32, i32) {
    %c0_i32 = arith.constant 0 : i32
    %c0_i32_0 = arith.constant 0 : i32
    return %arg0, %c0_i32 : i32, i32
  }
  func.func @transform_1(%arg0: i32) -> (i32, i32) {
    %c0_i32 = arith.constant 0 : i32
    %c0_i32_0 = arith.constant 0 : i32
    %c0_i32_1 = arith.constant 0 : i32
    return %c0_i32, %c0_i32_0 : i32, i32
  }
  func.func @transform_2(%arg0: i32) -> (i32, i32) {
    %c0_i32 = arith.constant 0 : i32
    %c0_i32_0 = arith.constant 0 : i32
    %c0_i32_1 = arith.constant 0 : i32
    return %c0_i32, %c0_i32_0 : i32, i32
  }
  func.func @transform_3(%arg0: i32) -> (i32, i32) {
    %c0_i32 = arith.constant 0 : i32
    %c0_i32_0 = arith.constant 0 : i32
    %c0_i32_1 = arith.constant 0 : i32
    return %c0_i32, %c0_i32_0 : i32, i32
  }
  func.func @transform_4(%arg0: i32) -> (i32, i32) {
    %c0_i32 = arith.constant 0 : i32
    %c0_i32_0 = arith.constant 0 : i32
    %c0_i32_1 = arith.constant 0 : i32
    return %c0_i32, %c0_i32_0 : i32, i32
  }
  func.func @transform_5(%arg0: i32) -> (i32, i32) {
    %c0_i32 = arith.constant 0 : i32
    %c0_i32_0 = arith.constant 0 : i32
    return %arg0, %c0_i32 : i32, i32
  }
}

module attributes {stable_mosaic.version = 11 : i64} {
  func.func @_mlp_resident_kernel(%arg0: i32, %arg1: memref<16x128xbf16, #tpu.memory_space<vmem>>, %arg2: memref<128x128xbf16, #tpu.memory_space<vmem>>, %arg3: memref<1x128xf32, #tpu.memory_space<vmem>>, %arg4: memref<128x128xbf16, #tpu.memory_space<vmem>>, %arg5: memref<1x128xf32, #tpu.memory_space<vmem>>, %arg6: memref<16x128xf32, #tpu.memory_space<vmem>>) attributes {dimension_semantics = [#tpu.dimension_semantics<parallel>], iteration_bounds = array<i64: 1>, scalar_prefetch = 0 : i64, scratch_operands = 0 : i64, tpu.core_type = #tpu.core_type<tc>, window_params = [{transform_indices = @transform_0, window_bounds = array<i64: 16, 128>}, {pipeline_mode = #tpu.pipeline_mode<synchronous>, transform_indices = @transform_1, window_bounds = array<i64: 128, 128>}, {pipeline_mode = #tpu.pipeline_mode<synchronous>, transform_indices = @transform_2, window_bounds = array<i64: 1, 128>}, {pipeline_mode = #tpu.pipeline_mode<synchronous>, transform_indices = @transform_3, window_bounds = array<i64: 128, 128>}, {pipeline_mode = #tpu.pipeline_mode<synchronous>, transform_indices = @transform_4, window_bounds = array<i64: 1, 128>}, {transform_indices = @transform_5, window_bounds = array<i64: 16, 128>}]} {
    %c0 = arith.constant 0 : index
    %c0_0 = arith.constant 0 : index
    %0 = vector.load %arg1[%c0, %c0_0] : memref<16x128xbf16, #tpu.memory_space<vmem>>, vector<16x128xbf16>
    %c0_1 = arith.constant 0 : index
    %c0_2 = arith.constant 0 : index
    %1 = vector.load %arg2[%c0_1, %c0_2] : memref<128x128xbf16, #tpu.memory_space<vmem>>, vector<128x128xbf16>
    %cst = arith.constant dense<0.000000e+00> : vector<16x128xf32>
    %2 = tpu.matmul %0, %1, %cst {dimension_numbers = #tpu.dot_dimension_numbers<[1], [0], [0], [1], [0, 0, 1, 1], [], []>} : vector<16x128xbf16>, vector<128x128xbf16>, vector<16x128xf32> -> vector<16x128xf32>
    %c0_3 = arith.constant 0 : index
    %c0_4 = arith.constant 0 : index
    %3 = vector.load %arg3[%c0_3, %c0_4] : memref<1x128xf32, #tpu.memory_space<vmem>>, vector<1x128xf32>
    %4 = vector.broadcast %3 : vector<1x128xf32> to vector<16x128xf32>
    %5 = arith.addf %2, %4 : vector<16x128xf32>
    %cst_5 = arith.constant 0.000000e+00 : f32
    %6 = vector.broadcast %cst_5 : f32 to vector<16x128xf32>
    %7 = arith.maximumf %5, %6 : vector<16x128xf32>
    %8 = arith.truncf %7 : vector<16x128xf32> to vector<16x128xbf16>
    %c0_6 = arith.constant 0 : index
    %c0_7 = arith.constant 0 : index
    %9 = vector.load %arg4[%c0_6, %c0_7] : memref<128x128xbf16, #tpu.memory_space<vmem>>, vector<128x128xbf16>
    %cst_8 = arith.constant dense<0.000000e+00> : vector<16x128xf32>
    %10 = tpu.matmul %8, %9, %cst_8 {dimension_numbers = #tpu.dot_dimension_numbers<[1], [0], [0], [1], [0, 0, 1, 1], [], []>} : vector<16x128xbf16>, vector<128x128xbf16>, vector<16x128xf32> -> vector<16x128xf32>
    %c0_9 = arith.constant 0 : index
    %c0_10 = arith.constant 0 : index
    %11 = vector.load %arg5[%c0_9, %c0_10] : memref<1x128xf32, #tpu.memory_space<vmem>>, vector<1x128xf32>
    %12 = vector.broadcast %11 : vector<1x128xf32> to vector<16x128xf32>
    %13 = arith.addf %10, %12 : vector<16x128xf32>
    %c0_11 = arith.constant 0 : index
    %c0_12 = arith.constant 0 : index
    %14 = vector.load %arg6[%c0_11, %c0_12] : memref<16x128xf32, #tpu.memory_space<vmem>>, vector<16x128xf32>
    tpu.vector_store %arg6[%c0_11, %c0_12], %13 {strides = array<i32>} : memref<16x128xf32, #tpu.memory_space<vmem>>, vector<16x128xf32>,
    return
  }
  func.func @transform_0(%arg0: i32) -> (i32, i32) {
    %c0_i32 = arith.constant 0 : i32
    %c0_i32_0 = arith.constant 0 : i32
    return %arg0, %c0_i32 : i32, i32
  }
  func.func @transform_1(%arg0: i32) -> (i32, i32) {
    %c0_i32 = arith.constant 0 : i32
    %c0_i32_0 = arith.constant 0 : i32
    %c0_i32_1 = arith.constant 0 : i32
    return %c0_i32, %c0_i32_0 : i32, i32
  }
  func.func @transform_2(%arg0: i32) -> (i32, i32) {
    %c0_i32 = arith.constant 0 : i32
    %c0_i32_0 = arith.constant 0 : i32
    %c0_i32_1 = arith.constant 0 : i32
    return %c0_i32, %c0_i32_0 : i32, i32
  }
  func.func @transform_3(%arg0: i32) -> (i32, i32) {
    %c0_i32 = arith.constant 0 : i32
    %c0_i32_0 = arith.constant 0 : i32
    %c0_i32_1 = arith.constant 0 : i32
    return %c0_i32, %c0_i32_0 : i32, i32
  }
  func.func @transform_4(%arg0: i32) -> (i32, i32) {
    %c0_i32 = arith.constant 0 : i32
    %c0_i32_0 = arith.constant 0 : i32
    %c0_i32_1 = arith.constant 0 : i32
    return %c0_i32, %c0_i32_0 : i32, i32
  }
  func.func @transform_5(%arg0: i32) -> (i32, i32) {
    %c0_i32 = arith.constant 0 : i32
    %c0_i32_0 = arith.constant 0 : i32
    return %arg0, %c0_i32 : i32, i32
  }
}

</mosaic_0001>

<llo_original>
// kernel: tpu_custom_call.1
$region0: #{tpu_custom_call.1}
  #allocation0 [shape = 'u32[]', space=smem, size = 0x4, offset = 0x4, fixed_abs, tag = 'smem constant byte address 0x4 - core index']
  #allocation1 [shape = 'u32[72,128]{1,0:T(1,128)}', space=vmem, size = 0x9000, scoped, tag = 'internal scratch']
  %s0 = inlined_call_operand.hbm [shape: bf16[16,128], index: 0, kind: input, shape index: {}]
  %s1 = inlined_call_operand.hbm [shape: bf16[128,128], index: 1, kind: input, shape index: {}]
  %s2 = inlined_call_operand.vmem [shape: f32[1,128], index: 2, kind: input, shape index: {}]
  %s3 = inlined_call_operand.hbm [shape: bf16[128,128], index: 3, kind: input, shape index: {}]
  %s4 = inlined_call_operand.vmem [shape: f32[1,128], index: 4, kind: input, shape index: {}]
  %s5 = inlined_call_operand.hbm [shape: f32[16,128], index: 5, kind: output, shape index: {}]
  %s6 = sld [smem:[#allocation0]]
  $region42: #{tpu_custom_call.1} parent=0
    _
  %s8 = ssub.s32 1, %s6
  %s9 = scalar_select 0, %s8, %s6
  $region1: #{tpu_custom_call.1} parent=0
    #allocation2 [shape = 'u8[4096]{0}', space=vmem, size = 0x1000, scoped, tag = 'input window, operand 0, single buffered']
    #allocation3 [shape = 's32[1]{0}', space=sflag, size = 0x4, scoped, tag = 'scoped memory for tpu_custom_call.1']
    #allocation4 [shape = 's32[1]{0}', space=sflag, size = 0x4, scoped, tag = 'scoped memory for tpu_custom_call.1']
    #allocation5 [shape = 'u8[32768]{0}', space=vmem, size = 0x8000, scoped, tag = 'input window, operand 1, single buffered']
    #allocation6 [shape = 's32[1]{0}', space=sflag, size = 0x4, scoped, tag = 'scoped memory for tpu_custom_call.1']
    #allocation7 [shape = 'u8[32768]{0}', space=vmem, size = 0x8000, scoped, tag = 'input window, operand 3, single buffered']
    #allocation8 [shape = 'u8[8192]{0}', space=vmem, size = 0x2000, scoped, tag = 'output window, operand 0, single buffered']
    %10 = vsyncpa [#allocation3], 0
    %11 = vsyncpa [#allocation6], 0
    %12 = vsyncpa [#allocation4], 0
    // Predicated region
    $region2: #{tpu_custom_call.1} parent=1 // pred_check
      _
    $region3: #{tpu_custom_call.1} parent=1 // pred_check_branch
      %14 = sbr.rel (0) target = $region5
    $region4: #{tpu_custom_call.1} parent=1 // pred_region
      %16 = vsyncadd [#allocation3], 0
      %s17 = sshll.u32 %s0, 4
      %s18 = int_to_ptr.hbm [resolvable:$true] %s17
      %s19 = sshll.u32 [#allocation2], 4
      %s20 = int_to_ptr.vmem [resolvable:$true] %s19
      %25 = dma.hbm_to_vmem [thread:$0]  %s18, 128, %s20, [#allocation3], 64, 64, 4
    $region5: #{tpu_custom_call.1} parent=1 // pred_fallthru
      _
    // Predicated region
    $region6: #{tpu_custom_call.1} parent=1 // pred_check
      _
    $region7: #{tpu_custom_call.1} parent=1 // pred_check_branch
      %27 = sbr.rel (0) target = $region9
    $region8: #{tpu_custom_call.1} parent=1 // pred_region
      %29 = vsyncadd [#allocation6], 0
      %s30 = sshll.u32 %s1, 4
      %s31 = int_to_ptr.hbm [resolvable:$true] %s30
      %s32 = sshll.u32 [#allocation5], 4
      %s33 = int_to_ptr.vmem [resolvable:$true] %s32
      %38 = dma.hbm_to_vmem [thread:$0]  %s31, 1024, %s33, [#allocation6], 64, 64, 4
    $region9: #{tpu_custom_call.1} parent=1 // pred_fallthru
      _
    // Predicated region
    $region10: #{tpu_custom_call.1} parent=1 // pred_check
      _
    $region11: #{tpu_custom_call.1} parent=1 // pred_check_branch
      %40 = sbr.rel (0) target = $region13
    $region12: #{tpu_custom_call.1} parent=1 // pred_region
      _
    $region13: #{tpu_custom_call.1} parent=1 // pred_fallthru
      _
    // Predicated region
    $region14: #{tpu_custom_call.1} parent=1 // pred_check
      _
    $region15: #{tpu_custom_call.1} parent=1 // pred_check_branch
      %42 = sbr.rel (0) target = $region17
    $region16: #{tpu_custom_call.1} parent=1 // pred_region
      %44 = vsyncadd [#allocation6], 0
      %s45 = sshll.u32 %s3, 4
      %s46 = int_to_ptr.hbm [resolvable:$true] %s45
      %s47 = sshll.u32 [#allocation7], 4
      %s48 = int_to_ptr.vmem [resolvable:$true] %s47
      %53 = dma.hbm_to_vmem [thread:$0]  %s46, 1024, %s48, [#allocation6], 64, 64, 4
    $region17: #{tpu_custom_call.1} parent=1 // pred_fallthru
      _
    // Predicated region
    $region18: #{tpu_custom_call.1} parent=1 // pred_check
      _
    $region19: #{tpu_custom_call.1} parent=1 // pred_check_branch
      %55 = sbr.rel (0) target = $region21
    $region20: #{tpu_custom_call.1} parent=1 // pred_region
      _
    $region21: #{tpu_custom_call.1} parent=1 // pred_fallthru
      _
    // Predicated region
    $region22: #{tpu_custom_call.1} parent=1 // pred_check
      _
    $region23: #{tpu_custom_call.1} parent=1 // pred_check_branch
      %57 = sbr.rel (0) target = $region25
    $region24: #{tpu_custom_call.1} parent=1 // pred_region
      %59 = dma.done [#allocation3], 128
    $region25: #{tpu_custom_call.1} parent=1 // pred_fallthru
      _
    // Predicated region
    $region26: #{tpu_custom_call.1} parent=1 // pred_check
      _
    $region27: #{tpu_custom_call.1} parent=1 // pred_check_branch
      %61 = sbr.rel (0) target = $region29
    $region28: #{tpu_custom_call.1} parent=1 // pred_region
      %63 = dma.done [#allocation6], 1024
    $region29: #{tpu_custom_call.1} parent=1 // pred_fallthru
      _
    // Predicated region
    $region30: #{tpu_custom_call.1} parent=1 // pred_check
      _
    $region31: #{tpu_custom_call.1} parent=1 // pred_check_branch
      %65 = sbr.rel (0) target = $region33
    $region32: #{tpu_custom_call.1} parent=1 // pred_region
      %67 = dma.done [#allocation6], 1024
    $region33: #{tpu_custom_call.1} parent=1 // pred_fallthru
      _
    %v68 = vld [vmem:[#allocation2] sm:$0xf]
    %v69 = vld [vmem:[#allocation2 + $0x4] sm:$0xf]
    %v70 = vld [vmem:[#allocation5] sm:$0xf]
    %v71 = vld [vmem:[#allocation5 + $0x4] sm:$0xf]
    %v72 = vld [vmem:[#allocation5 + $0x8] sm:$0xf]
    %v73 = vld [vmem:[#allocation5 + $0xc] sm:$0xf]
    %v74 = vld [vmem:[#allocation5 + $0x10] sm:$0xf]
    %v75 = vld [vmem:[#allocation5 + $0x14] sm:$0xf]
    %v76 = vld [vmem:[#allocation5 + $0x18] sm:$0xf]
    %v77 = vld [vmem:[#allocation5 + $0x1c] sm:$0xf]
    %v78 = vld [vmem:[#allocation5 + $0x20] sm:$0xf]
    %v79 = vld [vmem:[#allocation5 + $0x24] sm:$0xf]
    %v80 = vld [vmem:[#allocation5 + $0x28] sm:$0xf]
    %v81 = vld [vmem:[#allocation5 + $0x2c] sm:$0xf]
    %v82 = vld [vmem:[#allocation5 + $0x30] sm:$0xf]
    %v83 = vld [vmem:[#allocation5 + $0x34] sm:$0xf]
    %v84 = vld [vmem:[#allocation5 + $0x38] sm:$0xf]
    %v85 = vld [vmem:[#allocation5 + $0x3c] sm:$0xf]
    %v86 = vld [vmem:[%s2] sm:$0x1]
    %v88 = vperm.slane %v86, 0
    %v92 = vunpack.c.l.b16 %v68
    %v93 = vunpack.c.l.b16 %v69
    %v94 = vpack.c.b16 %v93, %v92
    %v112 = vunpack.c.l.b16 %v70
    %v113 = vunpack.c.l.b16 %v71
    %v114 = vunpack.c.l.b16 %v72
    %v115 = vunpack.c.l.b16 %v73
    %v116 = vunpack.c.l.b16 %v74
    %v117 = vunpack.c.l.b16 %v75
    %v118 = vunpack.c.l.b16 %v76
    %v119 = vunpack.c.l.b16 %v77
    %v120 = vunpack.c.l.b16 %v78
    %v121 = vunpack.c.l.b16 %v79
    %v122 = vunpack.c.l.b16 %v80
    %v123 = vunpack.c.l.b16 %v81
    %v124 = vunpack.c.l.b16 %v82
    %v125 = vunpack.c.l.b16 %v83
    %v126 = vunpack.c.l.b16 %v84
    %v127 = vunpack.c.l.b16 %v85
    %v128 = vpack.c.b16 %v113, %v112
    %v129 = vpack.c.b16 %v115, %v114
    %v130 = vpack.c.b16 %v117, %v116
    %v131 = vpack.c.b16 %v119, %v118
    %v132 = vpack.c.b16 %v121, %v120
    %v133 = vpack.c.b16 %v123, %v122
    %v134 = vpack.c.b16 %v125, %v124
    %v135 = vpack.c.b16 %v127, %v126
    %144 = vmatpush.bf16.msra.mxu0 %v135
    %145 = vmatpush.bf16.msra.mxu0 %v134
    %146 = vmatpush.bf16.msra.mxu0 %v133
    %147 = vmatpush.bf16.msra.mxu0 %v132
    %148 = vmatpush.bf16.msra.mxu0 %v131
    %149 = vmatpush.bf16.msra.mxu0 %v130
    %150 = vmatpush.bf16.msra.mxu0 %v129
    %151 = vmatpush.bf16.msra.mxu0 %v128
    %152 = vmatmul.bf16.gmra.mxu0 %v94
    %v153 = vpop.f32.mrf.mxu0
    %v154 = vadd.f32 %v88, %v153
    %v155 = vpop.f32.mrf.mxu0
    %v156 = vadd.f32 %v88, %v155
    %157 = vdwg.mxu0
    %v158 = vmax.f32 %v154, 0.0
    %v159 = vmax.f32 %v156, 0.0
    %v160 = vpack.c.bf16 %v159, %v158
    %v161 = vld [vmem:[#allocation7] sm:$0xf]
    %v162 = vld [vmem:[#allocation7 + $0x4] sm:$0xf]
    %v163 = vld [vmem:[#allocation7 + $0x8] sm:$0xf]
    %v164 = vld [vmem:[#allocation7 + $0xc] sm:$0xf]
    %v165 = vld [vmem:[#allocation7 + $0x10] sm:$0xf]
    %v166 = vld [vmem:[#allocation7 + $0x14] sm:$0xf]
    %v167 = vld [vmem:[#allocation7 + $0x18] sm:$0xf]
    %v168 = vld [vmem:[#allocation7 + $0x1c] sm:$0xf]
    %v169 = vld [vmem:[#allocation7 + $0x20] sm:$0xf]
    %v170 = vld [vmem:[#allocation7 + $0x24] sm:$0xf]
    %v171 = vld [vmem:[#allocation7 + $0x28] sm:$0xf]
    %v172 = vld [vmem:[#allocation7 + $0x2c] sm:$0xf]
    %v173 = vld [vmem:[#allocation7 + $0x30] sm:$0xf]
    %v174 = vld [vmem:[#allocation7 + $0x34] sm:$0xf]
    %v175 = vld [vmem:[#allocation7 + $0x38] sm:$0xf]
    %v176 = vld [vmem:[#allocation7 + $0x3c] sm:$0xf]
    %v177 = vld [vmem:[%s4] sm:$0x1]
    %v179 = vperm.slane %v177, 0
    %v197 = vunpack.c.l.b16 %v161
    %v198 = vunpack.c.l.b16 %v162
    %v199 = vunpack.c.l.b16 %v163
    %v200 = vunpack.c.l.b16 %v164
    %v201 = vunpack.c.l.b16 %v165
    %v202 = vunpack.c.l.b16 %v166
    %v203 = vunpack.c.l.b16 %v167
    %v204 = vunpack.c.l.b16 %v168
    %v205 = vunpack.c.l.b16 %v169
    %v206 = vunpack.c.l.b16 %v170
    %v207 = vunpack.c.l.b16 %v171
    %v208 = vunpack.c.l.b16 %v172
    %v209 = vunpack.c.l.b16 %v173
    %v210 = vunpack.c.l.b16 %v174
    %v211 = vunpack.c.l.b16 %v175
    %v212 = vunpack.c.l.b16 %v176
    %v213 = vpack.c.b16 %v198, %v197
    %v214 = vpack.c.b16 %v200, %v199
    %v215 = vpack.c.b16 %v202, %v201
    %v216 = vpack.c.b16 %v204, %v203
    %v217 = vpack.c.b16 %v206, %v205
    %v218 = vpack.c.b16 %v208, %v207
    %v219 = vpack.c.b16 %v210, %v209
    %v220 = vpack.c.b16 %v212, %v211
    %229 = vmatpush.bf16.msra.mxu0 %v220
    %230 = vmatpush.bf16.msra.mxu0 %v219
    %231 = vmatpush.bf16.msra.mxu0 %v218
    %232 = vmatpush.bf16.msra.mxu0 %v217
    %233 = vmatpush.bf16.msra.mxu0 %v216
    %234 = vmatpush.bf16.msra.mxu0 %v215
    %235 = vmatpush.bf16.msra.mxu0 %v214
    %236 = vmatpush.bf16.msra.mxu0 %v213
    %237 = vmatmul.bf16.gmra.mxu0 %v160
    %v238 = vpop.f32.mrf.mxu0
    %v239 = vadd.f32 %v179, %v238
    %v240 = vpop.f32.mrf.mxu0
    %v241 = vadd.f32 %v179, %v240
    %242 = vdwg.mxu0
    %243 = vst [vmem:[#allocation8] sm:$0xff] %v239
    %244 = vst [vmem:[#allocation8 + $0x8] sm:$0xff] %v241
    // Predicated region
    $region34: #{tpu_custom_call.1} parent=1 // pred_check
      _
    $region35: #{tpu_custom_call.1} parent=1 // pred_check_branch
      %246 = sbr.rel (0) target = $region37
    $region36: #{tpu_custom_call.1} parent=1 // pred_region
      %248 = vsyncadd [#allocation4], 0
      %s249 = sshll.u32 [#allocation8], 4
      %s250 = int_to_ptr.vmem [resolvable:$true] %s249
      %s251 = sshll.u32 %s5, 4
      %s252 = int_to_ptr.hbm [resolvable:$true] %s251
      %257 = dma.vmem_to_hbm [thread:$0]  %s250, 256, %s252, [#allocation4], 128, 128, 8
    $region37: #{tpu_custom_call.1} parent=1 // pred_fallthru
      _
    // Predicated region
    $region38: #{tpu_custom_call.1} parent=1 // pred_check
      _
    $region39: #{tpu_custom_call.1} parent=1 // pred_check_branch
      %259 = sbr.rel (0) target = $region41
    $region40: #{tpu_custom_call.1} parent=1 // pred_region
      %261 = dma.done [#allocation4], 256
    $region41: #{tpu_custom_call.1} parent=1 // pred_fallthru
      _
    %262 = vsyncpa [#allocation3], 1
    %263 = vsyncpa [#allocation6], 1
    %264 = vsyncpa [#allocation4], 1

// kernel: tpu_custom_call.1
$region0: #{tpu_custom_call.1}
  #allocation0 [shape = 'u32[]', space=smem, size = 0x4, offset = 0x4, fixed_abs, tag = 'smem constant byte address 0x4 - core index']
  #allocation1 [shape = 'u32[72,128]{1,0:T(1,128)}', space=vmem, size = 0x9000, scoped, tag = 'internal scratch']
  %s0 = inlined_call_operand.hbm [shape: bf16[16,128], index: 0, kind: input, shape index: {}]
  %s1 = inlined_call_operand.hbm [shape: bf16[128,128], index: 1, kind: input, shape index: {}]
  %s2 = inlined_call_operand.vmem [shape: f32[1,128], index: 2, kind: input, shape index: {}]
  %s3 = inlined_call_operand.hbm [shape: bf16[128,128], index: 3, kind: input, shape index: {}]
  %s4 = inlined_call_operand.vmem [shape: f32[1,128], index: 4, kind: input, shape index: {}]
  %s5 = inlined_call_operand.hbm [shape: f32[16,128], index: 5, kind: output, shape index: {}]
  %s6 = sld [smem:[#allocation0]]
  $region42: #{tpu_custom_call.1} parent=0
    _
  %s8 = ssub.s32 1, %s6
  %s9 = scalar_select 0, %s8, %s6
  $region1: #{tpu_custom_call.1} parent=0
    #allocation2 [shape = 'u8[4096]{0}', space=vmem, size = 0x1000, scoped, tag = 'input window, operand 0, single buffered']
    #allocation3 [shape = 's32[1]{0}', space=sflag, size = 0x4, scoped, tag = 'scoped memory for tpu_custom_call.1']
    #allocation4 [shape = 's32[1]{0}', space=sflag, size = 0x4, scoped, tag = 'scoped memory for tpu_custom_call.1']
    #allocation5 [shape = 'u8[32768]{0}', space=vmem, size = 0x8000, scoped, tag = 'input window, operand 1, single buffered']
    #allocation6 [shape = 's32[1]{0}', space=sflag, size = 0x4, scoped, tag = 'scoped memory for tpu_custom_call.1']
    #allocation7 [shape = 'u8[32768]{0}', space=vmem, size = 0x8000, scoped, tag = 'input window, operand 3, single buffered']
    #allocation8 [shape = 'u8[8192]{0}', space=vmem, size = 0x2000, scoped, tag = 'output window, operand 0, single buffered']
    %10 = vsyncpa [#allocation3], 0
    %11 = vsyncpa [#allocation6], 0
    %12 = vsyncpa [#allocation4], 0
    // Predicated region
    $region2: #{tpu_custom_call.1} parent=1 // pred_check
      _
    $region3: #{tpu_custom_call.1} parent=1 // pred_check_branch
      %14 = sbr.rel (0) target = $region5
    $region4: #{tpu_custom_call.1} parent=1 // pred_region
      %16 = vsyncadd [#allocation3], 0
      %s17 = sshll.u32 %s0, 4
      %s18 = int_to_ptr.hbm [resolvable:$true] %s17
      %s19 = sshll.u32 [#allocation2], 4
      %s20 = int_to_ptr.vmem [resolvable:$true] %s19
      %25 = dma.hbm_to_vmem [thread:$0]  %s18, 128, %s20, [#allocation3], 64, 64, 4
    $region5: #{tpu_custom_call.1} parent=1 // pred_fallthru
      _
    // Predicated region
    $region6: #{tpu_custom_call.1} parent=1 // pred_check
      _
    $region7: #{tpu_custom_call.1} parent=1 // pred_check_branch
      %27 = sbr.rel (0) target = $region9
    $region8: #{tpu_custom_call.1} parent=1 // pred_region
      %29 = vsyncadd [#allocation6], 0
      %s30 = sshll.u32 %s1, 4
      %s31 = int_to_ptr.hbm [resolvable:$true] %s30
      %s32 = sshll.u32 [#allocation5], 4
      %s33 = int_to_ptr.vmem [resolvable:$true] %s32
      %38 = dma.hbm_to_vmem [thread:$0]  %s31, 1024, %s33, [#allocation6], 64, 64, 4
    $region9: #{tpu_custom_call.1} parent=1 // pred_fallthru
      _
    // Predicated region
    $region10: #{tpu_custom_call.1} parent=1 // pred_check
      _
    $region11: #{tpu_custom_call.1} parent=1 // pred_check_branch
      %40 = sbr.rel (0) target = $region13
    $region12: #{tpu_custom_call.1} parent=1 // pred_region
      _
    $region13: #{tpu_custom_call.1} parent=1 // pred_fallthru
      _
    // Predicated region
    $region14: #{tpu_custom_call.1} parent=1 // pred_check
      _
    $region15: #{tpu_custom_call.1} parent=1 // pred_check_branch
      %42 = sbr.rel (0) target = $region17
    $region16: #{tpu_custom_call.1} parent=1 // pred_region
      %44 = vsyncadd [#allocation6], 0
      %s45 = sshll.u32 %s3, 4
      %s46 = int_to_ptr.hbm [resolvable:$true] %s45
      %s47 = sshll.u32 [#allocation7], 4
      %s48 = int_to_ptr.vmem [resolvable:$true] %s47
      %53 = dma.hbm_to_vmem [thread:$0]  %s46, 1024, %s48, [#allocation6], 64, 64, 4
    $region17: #{tpu_custom_call.1} parent=1 // pred_fallthru
      _
    // Predicated region
    $region18: #{tpu_custom_call.1} parent=1 // pred_check
      _
    $region19: #{tpu_custom_call.1} parent=1 // pred_check_branch
      %55 = sbr.rel (0) target = $region21
    $region20: #{tpu_custom_call.1} parent=1 // pred_region
      _
    $region21: #{tpu_custom_call.1} parent=1 // pred_fallthru
      _
    // Predicated region
    $region22: #{tpu_custom_call.1} parent=1 // pred_check
      _
    $region23: #{tpu_custom_call.1} parent=1 // pred_check_branch
      %57 = sbr.rel (0) target = $region25
    $region24: #{tpu_custom_call.1} parent=1 // pred_region
      %59 = dma.done [#allocation3], 128
    $region25: #{tpu_custom_call.1} parent=1 // pred_fallthru
      _
    // Predicated region
    $region26: #{tpu_custom_call.1} parent=1 // pred_check
      _
    $region27: #{tpu_custom_call.1} parent=1 // pred_check_branch
      %61 = sbr.rel (0) target = $region29
    $region28: #{tpu_custom_call.1} parent=1 // pred_region
      %63 = dma.done [#allocation6], 1024
    $region29: #{tpu_custom_call.1} parent=1 // pred_fallthru
      _
    // Predicated region
    $region30: #{tpu_custom_call.1} parent=1 // pred_check
      _
    $region31: #{tpu_custom_call.1} parent=1 // pred_check_branch
      %65 = sbr.rel (0) target = $region33
    $region32: #{tpu_custom_call.1} parent=1 // pred_region
      %67 = dma.done [#allocation6], 1024
    $region33: #{tpu_custom_call.1} parent=1 // pred_fallthru
      _
    %v68 = vld [vmem:[#allocation2] sm:$0xf]
    %v69 = vld [vmem:[#allocation2 + $0x4] sm:$0xf]
    %v70 = vld [vmem:[#allocation5] sm:$0xf]
    %v71 = vld [vmem:[#allocation5 + $0x4] sm:$0xf]
    %v72 = vld [vmem:[#allocation5 + $0x8] sm:$0xf]
    %v73 = vld [vmem:[#allocation5 + $0xc] sm:$0xf]
    %v74 = vld [vmem:[#allocation5 + $0x10] sm:$0xf]
    %v75 = vld [vmem:[#allocation5 + $0x14] sm:$0xf]
    %v76 = vld [vmem:[#allocation5 + $0x18] sm:$0xf]
    %v77 = vld [vmem:[#allocation5 + $0x1c] sm:$0xf]
    %v78 = vld [vmem:[#allocation5 + $0x20] sm:$0xf]
    %v79 = vld [vmem:[#allocation5 + $0x24] sm:$0xf]
    %v80 = vld [vmem:[#allocation5 + $0x28] sm:$0xf]
    %v81 = vld [vmem:[#allocation5 + $0x2c] sm:$0xf]
    %v82 = vld [vmem:[#allocation5 + $0x30] sm:$0xf]
    %v83 = vld [vmem:[#allocation5 + $0x34] sm:$0xf]
    %v84 = vld [vmem:[#allocation5 + $0x38] sm:$0xf]
    %v85 = vld [vmem:[#allocation5 + $0x3c] sm:$0xf]
    %v86 = vld [vmem:[%s2] sm:$0x1]
    %v88 = vperm.slane %v86, 0
    %v92 = vunpack.c.l.b16 %v68
    %v93 = vunpack.c.l.b16 %v69
    %v94 = vpack.c.b16 %v93, %v92
    %v112 = vunpack.c.l.b16 %v70
    %v113 = vunpack.c.l.b16 %v71
    %v114 = vunpack.c.l.b16 %v72
    %v115 = vunpack.c.l.b16 %v73
    %v116 = vunpack.c.l.b16 %v74
    %v117 = vunpack.c.l.b16 %v75
    %v118 = vunpack.c.l.b16 %v76
    %v119 = vunpack.c.l.b16 %v77
    %v120 = vunpack.c.l.b16 %v78
    %v121 = vunpack.c.l.b16 %v79
    %v122 = vunpack.c.l.b16 %v80
    %v123 = vunpack.c.l.b16 %v81
    %v124 = vunpack.c.l.b16 %v82
    %v125 = vunpack.c.l.b16 %v83
    %v126 = vunpack.c.l.b16 %v84
    %v127 = vunpack.c.l.b16 %v85
    %v128 = vpack.c.b16 %v113, %v112
    %v129 = vpack.c.b16 %v115, %v114
    %v130 = vpack.c.b16 %v117, %v116
    %v131 = vpack.c.b16 %v119, %v118
    %v132 = vpack.c.b16 %v121, %v120
    %v133 = vpack.c.b16 %v123, %v122
    %v134 = vpack.c.b16 %v125, %v124
    %v135 = vpack.c.b16 %v127, %v126
    %144 = vmatpush.bf16.msra.mxu0 %v135
    %145 = vmatpush.bf16.msra.mxu0 %v134
    %146 = vmatpush.bf16.msra.mxu0 %v133
    %147 = vmatpush.bf16.msra.mxu0 %v132
    %148 = vmatpush.bf16.msra.mxu0 %v131
    %149 = vmatpush.bf16.msra.mxu0 %v130
    %150 = vmatpush.bf16.msra.mxu0 %v129
    %151 = vmatpush.bf16.msra.mxu0 %v128
    %152 = vmatmul.bf16.gmra.mxu0 %v94
    %v153 = vpop.f32.mrf.mxu0
    %v154 = vadd.f32 %v88, %v153
    %v155 = vpop.f32.mrf.mxu0
    %v156 = vadd.f32 %v88, %v155
    %157 = vdwg.mxu0
    %v158 = vmax.f32 %v154, 0.0
    %v159 = vmax.f32 %v156, 0.0
    %v160 = vpack.c.bf16 %v159, %v158
    %v161 = vld [vmem:[#allocation7] sm:$0xf]
    %v162 = vld [vmem:[#allocation7 + $0x4] sm:$0xf]
    %v163 = vld [vmem:[#allocation7 + $0x8] sm:$0xf]
    %v164 = vld [vmem:[#allocation7 + $0xc] sm:$0xf]
    %v165 = vld [vmem:[#allocation7 + $0x10] sm:$0xf]
    %v166 = vld [vmem:[#allocation7 + $0x14] sm:$0xf]
    %v167 = vld [vmem:[#allocation7 + $0x18] sm:$0xf]
    %v168 = vld [vmem:[#allocation7 + $0x1c] sm:$0xf]
    %v169 = vld [vmem:[#allocation7 + $0x20] sm:$0xf]
    %v170 = vld [vmem:[#allocation7 + $0x24] sm:$0xf]
    %v171 = vld [vmem:[#allocation7 + $0x28] sm:$0xf]
    %v172 = vld [vmem:[#allocation7 + $0x2c] sm:$0xf]
    %v173 = vld [vmem:[#allocation7 + $0x30] sm:$0xf]
    %v174 = vld [vmem:[#allocation7 + $0x34] sm:$0xf]
    %v175 = vld [vmem:[#allocation7 + $0x38] sm:$0xf]
    %v176 = vld [vmem:[#allocation7 + $0x3c] sm:$0xf]
    %v177 = vld [vmem:[%s4] sm:$0x1]
    %v179 = vperm.slane %v177, 0
    %v197 = vunpack.c.l.b16 %v161
    %v198 = vunpack.c.l.b16 %v162
    %v199 = vunpack.c.l.b16 %v163
    %v200 = vunpack.c.l.b16 %v164
    %v201 = vunpack.c.l.b16 %v165
    %v202 = vunpack.c.l.b16 %v166
    %v203 = vunpack.c.l.b16 %v167
    %v204 = vunpack.c.l.b16 %v168
    %v205 = vunpack.c.l.b16 %v169
    %v206 = vunpack.c.l.b16 %v170
    %v207 = vunpack.c.l.b16 %v171
    %v208 = vunpack.c.l.b16 %v172
    %v209 = vunpack.c.l.b16 %v173
    %v210 = vunpack.c.l.b16 %v174
    %v211 = vunpack.c.l.b16 %v175
    %v212 = vunpack.c.l.b16 %v176
    %v213 = vpack.c.b16 %v198, %v197
    %v214 = vpack.c.b16 %v200, %v199
    %v215 = vpack.c.b16 %v202, %v201
    %v216 = vpack.c.b16 %v204, %v203
    %v217 = vpack.c.b16 %v206, %v205
    %v218 = vpack.c.b16 %v208, %v207
    %v219 = vpack.c.b16 %v210, %v209
    %v220 = vpack.c.b16 %v212, %v211
    %229 = vmatpush.bf16.msra.mxu0 %v220
    %230 = vmatpush.bf16.msra.mxu0 %v219
    %231 = vmatpush.bf16.msra.mxu0 %v218
    %232 = vmatpush.bf16.msra.mxu0 %v217
    %233 = vmatpush.bf16.msra.mxu0 %v216
    %234 = vmatpush.bf16.msra.mxu0 %v215
    %235 = vmatpush.bf16.msra.mxu0 %v214
    %236 = vmatpush.bf16.msra.mxu0 %v213
    %237 = vmatmul.bf16.gmra.mxu0 %v160
    %v238 = vpop.f32.mrf.mxu0
    %v239 = vadd.f32 %v179, %v238
    %v240 = vpop.f32.mrf.mxu0
    %v241 = vadd.f32 %v179, %v240
    %242 = vdwg.mxu0
    %243 = vst [vmem:[#allocation8] sm:$0xff] %v239
    %244 = vst [vmem:[#allocation8 + $0x8] sm:$0xff] %v241
    // Predicated region
    $region34: #{tpu_custom_call.1} parent=1 // pred_check
      _
    $region35: #{tpu_custom_call.1} parent=1 // pred_check_branch
      %246 = sbr.rel (0) target = $region37
    $region36: #{tpu_custom_call.1} parent=1 // pred_region
      %248 = vsyncadd [#allocation4], 0
      %s249 = sshll.u32 [#allocation8], 4
      %s250 = int_to_ptr.vmem [resolvable:$true] %s249
      %s251 = sshll.u32 %s5, 4
      %s252 = int_to_ptr.hbm [resolvable:$true] %s251
      %257 = dma.vmem_to_hbm [thread:$0]  %s250, 256, %s252, [#allocation4], 128, 128, 8
    $region37: #{tpu_custom_call.1} parent=1 // pred_fallthru
      _
    // Predicated region
    $region38: #{tpu_custom_call.1} parent=1 // pred_check
      _
    $region39: #{tpu_custom_call.1} parent=1 // pred_check_branch
      %259 = sbr.rel (0) target = $region41
    $region40: #{tpu_custom_call.1} parent=1 // pred_region
      %261 = dma.done [#allocation4], 256
    $region41: #{tpu_custom_call.1} parent=1 // pred_fallthru
      _
    %262 = vsyncpa [#allocation3], 1
    %263 = vsyncpa [#allocation6], 1
    %264 = vsyncpa [#allocation4], 1

</llo_original>
